<compile_context>
chip_gen: v6e
topology: v6e:2x2x1
jax: 0.10.0
libtpu: 0.0.40
codegen_flags: <defaults>
</compile_context>

<pallas_src>
import jax
import jax.numpy as jnp
from jax.experimental import pallas as pl
from jax.experimental.pallas import tpu as pltpu


def decoder_kernel(z_ref, w1_ref, b1_ref, w2_ref, b2_ref, out_ref):
    # Layer 1: Linear + ReLU.  z arrives f32; cast to bf16 on the VPU (free)
    # for the MXU, accumulate in f32, do the bias/ReLU epilogue in f32.
    z_bf = z_ref[...].astype(jnp.bfloat16)
    h = jnp.dot(z_bf, w1_ref[...], preferred_element_type=jnp.float32)
    h = jnp.maximum(h + b1_ref[...], 0.0)            # b1 is (1, hidden) f32

    # Layer 2: Linear + Sigmoid.  Activations back to bf16 for the MXU.
    y = jnp.dot(h.astype(jnp.bfloat16), w2_ref[...],
                preferred_element_type=jnp.float32)
    y = y + b2_ref[...]                               # b2 is (1, dim_out) f32

    # Sigmoid via EUP exp + approximate reciprocal (vrcp) -> keeps the divide
    # on the EUP slot, off the VPU critical path.
    e = jnp.exp(-y)
    out_ref[...] = pl.reciprocal(1.0 + e, approx=True).astype(out_ref.dtype)


def decoder_forward(z, w1, b1, w2, b2, *, tb=1024, out_dtype=jnp.bfloat16):
    """Fused Decoder forward.

    z:  (B, dim_in) f32 (cast to bf16 inside the kernel).
    w1: (dim_in, hidden), w2: (hidden, dim_out) -- pass bf16 (hoisted cast).
    b1: (1, hidden), b2: (1, dim_out) f32.
    """
    B, dim_in = z.shape
    hidden = w1.shape[1]
    dim_out = w2.shape[1]

    # Clamp the tile: (a) never larger than B, (b) keep the grid >= 2 steps so
    # the "parallel" batch axis shards across both TensorCores on v7x,
    # (c) keep the sublane-8 alignment required for non-full block dims.
    half = ((pl.cdiv(B, 2) + 7) // 8) * 8
    tb = min(tb, max(8, half), B)

    flops = 2 * B * (dim_in * hidden + hidden * dim_out)
    bytes_accessed = (z.size * z.dtype.itemsize
                      + w1.size * w1.dtype.itemsize
                      + w2.size * w2.dtype.itemsize
                      + b1.size * b1.dtype.itemsize
                      + b2.size * b2.dtype.itemsize
                      + B * dim_out * jnp.dtype(out_dtype).itemsize)
    cost = pl.CostEstimate(flops=flops,
                           transcendentals=B * dim_out,
                           bytes_accessed=bytes_accessed)

    return pl.pallas_call(
        decoder_kernel,
        out_shape=jax.ShapeDtypeStruct((B, dim_out), out_dtype),
        grid=(pl.cdiv(B, tb),),
        in_specs=[
            # Streamed per grid step (double-buffered by Pallas).
            pl.BlockSpec((tb, dim_in), lambda i: (i, 0)),
            # VMEM-resident across the whole grid: constant index_map +
            # single buffer (no dead second buffer).
            pl.BlockSpec((dim_in, hidden), lambda i: (0, 0),
                         pipeline_mode=pl.Buffered(1)),
            pl.BlockSpec((1, hidden), lambda i: (0, 0),
                         pipeline_mode=pl.Buffered(1)),
            pl.BlockSpec((hidden, dim_out), lambda i: (0, 0),
                         pipeline_mode=pl.Buffered(1)),
            pl.BlockSpec((1, dim_out), lambda i: (0, 0),
                         pipeline_mode=pl.Buffered(1)),
        ],
        out_specs=pl.BlockSpec((tb, dim_out), lambda i: (i, 0)),
        compiler_params=pltpu.CompilerParams(
            dimension_semantics=("parallel",)),
        cost_estimate=cost,
    )(z, w1, b1, w2, b2)


def init_params(key, dim_in, hidden, dim_out):
    k1, k2, k3, k4 = jax.random.split(key, 4)
    w1 = jax.random.normal(k1, (dim_in, hidden), jnp.float32) / jnp.sqrt(dim_in)
    b1 = jax.random.normal(k2, (1, hidden), jnp.float32) * 0.01
    w2 = jax.random.normal(k3, (hidden, dim_out), jnp.float32) / jnp.sqrt(hidden)
    b2 = jax.random.normal(k4, (1, dim_out), jnp.float32) * 0.01
    return w1, b1, w2, b2


if __name__ == "__main__":
    # VAE-decoder-ish shapes: latent dim_in=32, hidden=64, dim_out=256.
    # B=512 with the >=2-step clamp gives tb=256 -> a 2-step grid, exercising
    # the pipeline and both TCs on v7x while staying tiny to compile/run.
    B, dim_in, hidden, dim_out = 512, 32, 64, 256

    key = jax.random.PRNGKey(0)
    kz, kp = jax.random.split(key)
    z = jax.random.normal(kz, (B, dim_in), jnp.float32)
    w1, b1, w2, b2 = init_params(kp, dim_in, hidden, dim_out)

    # Hoisted, one-time bf16 casts of the weights (in real use these are
    # cached / jit constants).  Biases stay f32 for the epilogue.
    w1_bf = w1.astype(jnp.bfloat16)
    w2_bf = w2.astype(jnp.bfloat16)

    out = decoder_forward(z, w1_bf, b1, w2_bf, b2)
    out = jax.block_until_ready(out)

    # Pure-JAX f32 reference.  Tolerance covers bf16 MXU inputs, bf16 output
    # quantization, and the approximate-reciprocal sigmoid (accum stays f32).
    h_ref = jnp.maximum(z @ w1 + b1, 0.0)
    ref = jax.nn.sigmoid(h_ref @ w2 + b2)
    assert out.shape == (B, dim_out)
    assert out.dtype == jnp.bfloat16
    assert jnp.allclose(out.astype(jnp.float32), ref, atol=3e-2, rtol=3e-2), (
        float(jnp.max(jnp.abs(out.astype(jnp.float32) - ref))))

    print("KERNEL_OK")
</pallas_src>

<mosaic_0001>
module attributes {stable_mosaic.version = 11 : i64} {
  func.func @decoder_kernel(%arg0: i32, %arg1: memref<256x32xf32, #tpu.memory_space<vmem>>, %arg2: memref<32x64xbf16, #tpu.memory_space<vmem>>, %arg3: memref<1x64xf32, #tpu.memory_space<vmem>>, %arg4: memref<64x256xbf16, #tpu.memory_space<vmem>>, %arg5: memref<1x256xf32, #tpu.memory_space<vmem>>, %arg6: memref<256x256xbf16, #tpu.memory_space<vmem>>) attributes {dimension_semantics = [#tpu.dimension_semantics<parallel>], iteration_bounds = array<i64: 2>, scalar_prefetch = 0 : i64, scratch_operands = 0 : i64, tpu.core_type = #tpu.core_type<tc>, window_params = [{transform_indices = @transform_0, window_bounds = array<i64: 256, 32>}, {pipeline_mode = #tpu.pipeline_mode<synchronous>, transform_indices = @transform_1, window_bounds = array<i64: 32, 64>}, {pipeline_mode = #tpu.pipeline_mode<synchronous>, transform_indices = @transform_2, window_bounds = array<i64: 1, 64>}, {pipeline_mode = #tpu.pipeline_mode<synchronous>, transform_indices = @transform_3, window_bounds = array<i64: 64, 256>}, {pipeline_mode = #tpu.pipeline_mode<synchronous>, transform_indices = @transform_4, window_bounds = array<i64: 1, 256>}, {transform_indices = @transform_5, window_bounds = array<i64: 256, 256>}]} {
    %c0 = arith.constant 0 : index
    %c0_0 = arith.constant 0 : index
    %0 = vector.load %arg1[%c0, %c0_0] : memref<256x32xf32, #tpu.memory_space<vmem>>, vector<256x32xf32>
    %1 = arith.truncf %0 : vector<256x32xf32> to vector<256x32xbf16>
    %c0_1 = arith.constant 0 : index
    %c0_2 = arith.constant 0 : index
    %2 = vector.load %arg2[%c0_1, %c0_2] : memref<32x64xbf16, #tpu.memory_space<vmem>>, vector<32x64xbf16>
    %cst = arith.constant dense<0.000000e+00> : vector<256x64xf32>
    %3 = tpu.matmul %1, %2, %cst {dimension_numbers = #tpu.dot_dimension_numbers<[1], [0], [0], [1], [0, 0, 1, 1], [], []>} : vector<256x32xbf16>, vector<32x64xbf16>, vector<256x64xf32> -> vector<256x64xf32>
    %c0_3 = arith.constant 0 : index
    %c0_4 = arith.constant 0 : index
    %4 = vector.load %arg3[%c0_3, %c0_4] : memref<1x64xf32, #tpu.memory_space<vmem>>, vector<1x64xf32>
    %5 = vector.broadcast %4 : vector<1x64xf32> to vector<256x64xf32>
    %6 = arith.addf %3, %5 : vector<256x64xf32>
    %cst_5 = arith.constant 0.000000e+00 : f32
    %7 = vector.broadcast %cst_5 : f32 to vector<256x64xf32>
    %8 = arith.maximumf %6, %7 : vector<256x64xf32>
    %9 = arith.truncf %8 : vector<256x64xf32> to vector<256x64xbf16>
    %c0_6 = arith.constant 0 : index
    %c0_7 = arith.constant 0 : index
    %10 = vector.load %arg4[%c0_6, %c0_7] : memref<64x256xbf16, #tpu.memory_space<vmem>>, vector<64x256xbf16>
    %cst_8 = arith.constant dense<0.000000e+00> : vector<256x256xf32>
    %11 = tpu.matmul %9, %10, %cst_8 {dimension_numbers = #tpu.dot_dimension_numbers<[1], [0], [0], [1], [0, 0, 1, 1], [], []>} : vector<256x64xbf16>, vector<64x256xbf16>, vector<256x256xf32> -> vector<256x256xf32>
    %c0_9 = arith.constant 0 : index
    %c0_10 = arith.constant 0 : index
    %12 = vector.load %arg5[%c0_9, %c0_10] : memref<1x256xf32, #tpu.memory_space<vmem>>, vector<1x256xf32>
    %13 = vector.broadcast %12 : vector<1x256xf32> to vector<256x256xf32>
    %14 = arith.addf %11, %13 : vector<256x256xf32>
    %cst_11 = arith.constant 0.000000e+00 : f32
    %15 = vector.broadcast %cst_11 : f32 to vector<256x256xf32>
    %16 = arith.subf %15, %14 : vector<256x256xf32>
    %17 = math.exp %16 : vector<256x256xf32>
    %cst_12 = arith.constant 1.000000e+00 : f32
    %18 = vector.broadcast %cst_12 : f32 to vector<256x256xf32>
    %19 = arith.addf %18, %17 : vector<256x256xf32>
    %20 = tpu.reciprocal %19 {approx = true} : vector<256x256xf32> -> vector<256x256xf32>
    %21 = arith.truncf %20 : vector<256x256xf32> to vector<256x256xbf16>
    %c0_13 = arith.constant 0 : index
    %c0_14 = arith.constant 0 : index
    %22 = vector.load %arg6[%c0_13, %c0_14] : memref<256x256xbf16, #tpu.memory_space<vmem>>, vector<256x256xbf16>
    tpu.vector_store %arg6[%c0_13, %c0_14], %21 {strides = array<i32>} : memref<256x256xbf16, #tpu.memory_space<vmem>>, vector<256x256xbf16>,
    return
  }
  func.func @transform_0(%arg0: i32) -> (i32, i32) {
    %c0_i32 = arith.constant 0 : i32
    %c0_i32_0 = arith.constant 0 : i32
    return %arg0, %c0_i32 : i32, i32
  }
  func.func @transform_1(%arg0: i32) -> (i32, i32) {
    %c0_i32 = arith.constant 0 : i32
    %c0_i32_0 = arith.constant 0 : i32
    %c0_i32_1 = arith.constant 0 : i32
    return %c0_i32, %c0_i32_0 : i32, i32
  }
  func.func @transform_2(%arg0: i32) -> (i32, i32) {
    %c0_i32 = arith.constant 0 : i32
    %c0_i32_0 = arith.constant 0 : i32
    %c0_i32_1 = arith.constant 0 : i32
    return %c0_i32, %c0_i32_0 : i32, i32
  }
  func.func @transform_3(%arg0: i32) -> (i32, i32) {
    %c0_i32 = arith.constant 0 : i32
    %c0_i32_0 = arith.constant 0 : i32
    %c0_i32_1 = arith.constant 0 : i32
    return %c0_i32, %c0_i32_0 : i32, i32
  }
  func.func @transform_4(%arg0: i32) -> (i32, i32) {
    %c0_i32 = arith.constant 0 : i32
    %c0_i32_0 = arith.constant 0 : i32
    %c0_i32_1 = arith.constant 0 : i32
    return %c0_i32, %c0_i32_0 : i32, i32
  }
  func.func @transform_5(%arg0: i32) -> (i32, i32) {
    %c0_i32 = arith.constant 0 : i32
    %c0_i32_0 = arith.constant 0 : i32
    return %arg0, %c0_i32 : i32, i32
  }
}

</mosaic_0001>

<llo_original>
// kernel: tpu_custom_call.1
$region0: #{tpu_custom_call.1}
  #allocation0 [shape = 'u32[]', space=smem, size = 0x4, offset = 0x4, fixed_abs, tag = 'smem constant byte address 0x4 - core index']
  #allocation1 [shape = 'u32[144,128]{1,0:T(1,128)}', space=vmem, size = 0x12000, scoped, tag = 'internal scratch']
  %s0 = inlined_call_operand.vmem [shape: f32[512,32], index: 0, kind: input, shape index: {}]
  %s1 = inlined_call_operand.vmem [shape: bf16[32,64], index: 1, kind: input, shape index: {}]
  %s2 = inlined_call_operand.vmem [shape: f32[1,64], index: 2, kind: input, shape index: {}]
  %s3 = inlined_call_operand.vmem [shape: bf16[64,256], index: 3, kind: input, shape index: {}]
  %s4 = inlined_call_operand.vmem [shape: f32[1,256], index: 4, kind: input, shape index: {}]
  %s5 = inlined_call_operand.hbm [shape: bf16[512,256], index: 5, kind: output, shape index: {}]
  %s6 = sld [smem:[#allocation0]]
  $region53: #{tpu_custom_call.1} parent=0
    _
  %s8 = ssub.s32 1, %s6
  %s9 = scalar_select 0, %s8, %s6
  $region1: #{tpu_custom_call.1} parent=0
    #allocation2 [shape = 'u8[262144]{0}', space=vmem, size = 0x40000, scoped, tag = 'output window, operand 0']
    #allocation3 [shape = 's32[2]{0}', space=sflag, size = 0x8, scoped, tag = 'scoped memory for tpu_custom_call.1']
    %10 = vsyncpa [#allocation3], 0
    %s11 = scalar_lea.sflag [#allocation3], 1
    %12 = vsyncpa %s11, 0
    loop: start=0, step=1, limit=4
    $region2: #{tpu_custom_call.1} parent=1 // loop_pre_header
      _
    $region3: #{tpu_custom_call.1} parent=1 // loop_header
      %s14 = sphi 0, %s18
      %p15 = scmp.ge.s32.totalorder %s14, 4
      %s24 = sphi 0, %s26
      %s27 = sphi 0, %s24
      %s28 = sphi 0, %s27
      %s44 = sphi 0, %s28
      %s48 = sphi 0, %s48
      %s50 = sphi 0, %s48
      %s51 = sphi 0, %s50
      %s65 = sphi 0, %s51
      %s69 = sphi 0, %s69
      %s71 = sphi 0, %s69
      %s72 = sphi 0, %s71
      %s86 = sphi 0, %s72
      %s90 = sphi 0, %s90
      %s92 = sphi 0, %s90
      %s93 = sphi 0, %s92
      %s107 = sphi 0, %s93
      %s111 = sphi 0, %s111
      %s113 = sphi 0, %s111
      %s114 = sphi 0, %s113
      %s128 = sphi 0, %s114
      %s134 = sphi 0, %s136
      %s137 = sphi 0, %s134
      %s138 = sphi 0, %s137
      %s154 = sphi 0, %s138
    $region4: #{tpu_custom_call.1} parent=1 // loop_header_branch
      %17 = sbr.rel (%p15) target = $region8
    $region5: #{tpu_custom_call.1} parent=1 // loop_body
      %s19 = ssub.s32 %s14, 1
      %s20 = ssub.s32 %s14, 2
      %s21 = sadd.s32 %s14, 1
      %s22 = ssub.s32 %s14, %s21
      %p23 = scmp.eq.s32.totalorder %s22, 0
      %s25 = sadd.s32 %s24, 1
      %s26 = scalar_select %p23, %s24, %s25
      %p29 = pneg %p23
      %p30 = scmp.eq.s32.totalorder %s14, 1
      %p31 = por %p29, %p30
      %p32 = scmp.ne.s32.totalorder %s24, %s27
      %p33 = scmp.eq.s32.totalorder %s14, 0
      %p34 = por %p32, %p33
      %p35 = scmp.ne.s32.totalorder %s24, %s27
      %p36 = scmp.eq.s32.totalorder %s19, 1
      %p37 = por %p35, %p36
      %p38 = scmp.ne.s32.totalorder %s27, %s28
      %p39 = scmp.eq.s32.totalorder %s19, 0
      %p40 = por %p38, %p39
      %p41 = scmp.ne.s32.totalorder %s27, %s28
      %p42 = scmp.eq.s32.totalorder %s20, 1
      %p43 = por %p41, %p42
      %p45 = scmp.ne.s32.totalorder %s28, %s44
      %p46 = scmp.eq.s32.totalorder %s20, 0
      %p47 = por %p45, %p46
      %s49 = sadd.s32 %s48, 1
      %p52 = scmp.eq.s32.totalorder %s14, 1
      %p53 = scmp.ne.s32.totalorder %s48, %s50
      %p54 = scmp.eq.s32.totalorder %s14, 0
      %p55 = por %p53, %p54
      %p56 = scmp.ne.s32.totalorder %s48, %s50
      %p57 = scmp.eq.s32.totalorder %s19, 1
      %p58 = por %p56, %p57
      %p59 = scmp.ne.s32.totalorder %s50, %s51
      %p60 = scmp.eq.s32.totalorder %s19, 0
      %p61 = por %p59, %p60
      %p62 = scmp.ne.s32.totalorder %s50, %s51
      %p63 = scmp.eq.s32.totalorder %s20, 1
      %p64 = por %p62, %p63
      %p66 = scmp.ne.s32.totalorder %s51, %s65
      %p67 = scmp.eq.s32.totalorder %s20, 0
      %p68 = por %p66, %p67
      %s70 = sadd.s32 %s69, 1
      %p73 = scmp.eq.s32.totalorder %s14, 1
      %p74 = scmp.ne.s32.totalorder %s69, %s71
      %p75 = scmp.eq.s32.totalorder %s14, 0
      %p76 = por %p74, %p75
      %p77 = scmp.ne.s32.totalorder %s69, %s71
      %p78 = scmp.eq.s32.totalorder %s19, 1
      %p79 = por %p77, %p78
      %p80 = scmp.ne.s32.totalorder %s71, %s72
      %p81 = scmp.eq.s32.totalorder %s19, 0
      %p82 = por %p80, %p81
      %p83 = scmp.ne.s32.totalorder %s71, %s72
      %p84 = scmp.eq.s32.totalorder %s20, 1
      %p85 = por %p83, %p84
      %p87 = scmp.ne.s32.totalorder %s72, %s86
      %p88 = scmp.eq.s32.totalorder %s20, 0
      %p89 = por %p87, %p88
      %s91 = sadd.s32 %s90, 1
      %p94 = scmp.eq.s32.totalorder %s14, 1
      %p95 = scmp.ne.s32.totalorder %s90, %s92
      %p96 = scmp.eq.s32.totalorder %s14, 0
      %p97 = por %p95, %p96
      %p98 = scmp.ne.s32.totalorder %s90, %s92
      %p99 = scmp.eq.s32.totalorder %s19, 1
      %p100 = por %p98, %p99
      %p101 = scmp.ne.s32.totalorder %s92, %s93
      %p102 = scmp.eq.s32.totalorder %s19, 0
      %p103 = por %p101, %p102
      %p104 = scmp.ne.s32.totalorder %s92, %s93
      %p105 = scmp.eq.s32.totalorder %s20, 1
      %p106 = por %p104, %p105
      %p108 = scmp.ne.s32.totalorder %s93, %s107
      %p109 = scmp.eq.s32.totalorder %s20, 0
      %p110 = por %p108, %p109
      %s112 = sadd.s32 %s111, 1
      %p115 = scmp.eq.s32.totalorder %s14, 1
      %p116 = scmp.ne.s32.totalorder %s111, %s113
      %p117 = scmp.eq.s32.totalorder %s14, 0
      %p118 = por %p116, %p117
      %p119 = scmp.ne.s32.totalorder %s111, %s113
      %p120 = scmp.eq.s32.totalorder %s19, 1
      %p121 = por %p119, %p120
      %p122 = scmp.ne.s32.totalorder %s113, %s114
      %p123 = scmp.eq.s32.totalorder %s19, 0
      %p124 = por %p122, %p123
      %p125 = scmp.ne.s32.totalorder %s113, %s114
      %p126 = scmp.eq.s32.totalorder %s20, 1
      %p127 = por %p125, %p126
      %p129 = scmp.ne.s32.totalorder %s114, %s128
      %p130 = scmp.eq.s32.totalorder %s20, 0
      %p131 = por %p129, %p130
      %s132 = ssub.s32 %s14, %s21
      %p133 = scmp.eq.s32.totalorder %s132, 0
      %s135 = sadd.s32 %s134, 1
      %s136 = scalar_select %p133, %s134, %s135
      %p139 = pneg %p133
      %p140 = scmp.eq.s32.totalorder %s14, 1
      %p141 = por %p139, %p140
      %p142 = scmp.ne.s32.totalorder %s134, %s137
      %p143 = scmp.eq.s32.totalorder %s14, 0
      %p144 = por %p142, %p143
      %p145 = scmp.ne.s32.totalorder %s134, %s137
      %p146 = scmp.eq.s32.totalorder %s19, 1
      %p147 = por %p145, %p146
      %p148 = scmp.ne.s32.totalorder %s137, %s138
      %p149 = scmp.eq.s32.totalorder %s19, 0
      %p150 = por %p148, %p149
      %p151 = scmp.ne.s32.totalorder %s137, %s138
      %p152 = scmp.eq.s32.totalorder %s20, 1
      %p153 = por %p151, %p152
      %p155 = scmp.ne.s32.totalorder %s138, %s154
      %p156 = scmp.eq.s32.totalorder %s20, 0
      %p157 = por %p155, %p156
      %p158 = scmp.le.s32.totalorder 1, %s14
      %p159 = scmp.lt.s32.totalorder %s14, 3
      %p160 = pnand %p158, %p159
      %p161 = pneg %p160
      // Predicated region
      $region9: #{tpu_custom_call.1} parent=5 // pred_check
        _
      $region10: #{tpu_custom_call.1} parent=5 // pred_check_branch
        %163 = sbr.rel (%p160) target = $region12
      $region11: #{tpu_custom_call.1} parent=5 // pred_region
        %s164 = ssub.s32 %s14, 1
        // Predicated region
        $region13: #{tpu_custom_call.1} parent=11 // pred_check
          %p165 = pneg %p61
        $region14: #{tpu_custom_call.1} parent=11 // pred_check_branch
          %167 = sbr.rel (%p165) target = $region16
        $region15: #{tpu_custom_call.1} parent=11 // pred_region
          _
        $region16: #{tpu_custom_call.1} parent=11 // pred_fallthru
          _
        // Predicated region
        $region17: #{tpu_custom_call.1} parent=11 // pred_check
          %p168 = pneg %p82
        $region18: #{tpu_custom_call.1} parent=11 // pred_check_branch
          %170 = sbr.rel (%p168) target = $region20
        $region19: #{tpu_custom_call.1} parent=11 // pred_region
          _
        $region20: #{tpu_custom_call.1} parent=11 // pred_fallthru
          _
        // Predicated region
        $region21: #{tpu_custom_call.1} parent=11 // pred_check
          %p171 = pneg %p103
        $region22: #{tpu_custom_call.1} parent=11 // pred_check_branch
          %173 = sbr.rel (%p171) target = $region24
        $region23: #{tpu_custom_call.1} parent=11 // pred_region
          _
        $region24: #{tpu_custom_call.1} parent=11 // pred_fallthru
          _
        // Predicated region
        $region25: #{tpu_custom_call.1} parent=11 // pred_check
          %p174 = pneg %p124
        $region26: #{tpu_custom_call.1} parent=11 // pred_check_branch
          %176 = sbr.rel (%p174) target = $region28
        $region27: #{tpu_custom_call.1} parent=11 // pred_region
          _
        $region28: #{tpu_custom_call.1} parent=11 // pred_fallthru
          _
      $region12: #{tpu_custom_call.1} parent=5 // pred_fallthru
        _
      %p177 = scmp.lt.s32.totalorder %s14, 2
      // Predicated region
      $region29: #{tpu_custom_call.1} parent=5 // pred_check
        %p178 = pneg %p177
      $region30: #{tpu_custom_call.1} parent=5 // pred_check_branch
        %180 = sbr.rel (%p178) target = $region32
      $region31: #{tpu_custom_call.1} parent=5 // pred_region
        // Predicated region
        $region33: #{tpu_custom_call.1} parent=31 // pred_check
          %p181 = pneg %p34
        $region34: #{tpu_custom_call.1} parent=31 // pred_check_branch
          %183 = sbr.rel (%p181) target = $region36
        $region35: #{tpu_custom_call.1} parent=31 // pred_region
          %s184 = smul.u32 32, %s14
          %p185 = scmp.lt.s32.totalorder %s184, 63
          %s186 = scalar_select %p185, %s184, 63
          %s187 = smul.addr %s186, 8
          %s188 = scalar_lea.vmem %s0, %s187
          %s189 = smul.u32 32, %s14
        $region36: #{tpu_custom_call.1} parent=31 // pred_fallthru
          _
      $region32: #{tpu_custom_call.1} parent=5 // pred_fallthru
        _
      %p190 = scmp.le.s32.totalorder 1, %s14
      %p191 = scmp.lt.s32.totalorder %s14, 3
      %p192 = pnand %p190, %p191
      %p193 = pneg %p192
      // Predicated region
      $region37: #{tpu_custom_call.1} parent=5 // pred_check
        _
      $region38: #{tpu_custom_call.1} parent=5 // pred_check_branch
        %195 = sbr.rel (%p192) target = $region40
      $region39: #{tpu_custom_call.1} parent=5 // pred_region
        %s196 = ssub.s32 %s14, 1
        %s197 = smul.u32 32, %s19
        %p198 = scmp.lt.s32.totalorder %s197, 63
        %s199 = scalar_select %p198, %s197, 63
        %s200 = smul.addr %s199, 8
        %s201 = scalar_lea.vmem %s0, %s200
        %p202 = pneg %p40
        %p203 = pneg %p37
        %p204 = pneg %p61
        %p205 = pneg %p58
        %p206 = pneg %p82
        %p207 = pneg %p79
        %p208 = pneg %p103
        %p209 = pneg %p100
        %p210 = pneg %p124
        %p211 = pneg %p121
        %p212 = pneg %p150
        %p213 = pneg %p147
        %s214 = sand.u32 %s137, 1
        %s215 = scalar_lea.sflag [#allocation3], %s214
        %s216 = sand.u32 %s137, 1
        %s217 = smul.addr %s216, 256
        %s218 = scalar_lea.vmem [#allocation2], %s217
        %s219 = smul.u32 32, %s19
        %p220 = scmp.lt.s32.totalorder %s219, 63
        %s221 = scalar_select %p220, %s219, 63
        %s222 = smul.addr %s221, 8
        %s223 = scalar_lea.vmem %s0, %s222
        %s224 = smul.u32 32, %s19
        %s225 = smul.u32 32, %s19
        %v227 = vld [vmem:[%s223] sm:$0xff]
        %v228 = vld [vmem:[%s223 + $0x8] sm:$0xff]
        %v229 = vld [vmem:[%s223 + $0x10] sm:$0xff]
        %v230 = vld [vmem:[%s223 + $0x18] sm:$0xff]
        %v231 = vld [vmem:[%s223 + $0x20] sm:$0xff]
        %v232 = vld [vmem:[%s223 + $0x28] sm:$0xff]
        %v233 = vld [vmem:[%s223 + $0x30] sm:$0xff]
        %v234 = vld [vmem:[%s223 + $0x38] sm:$0xff]
        %v235 = vld [vmem:[%s223 + $0x40] sm:$0xff]
        %v236 = vld [vmem:[%s223 + $0x48] sm:$0xff]
        %v237 = vld [vmem:[%s223 + $0x50] sm:$0xff]
        %v238 = vld [vmem:[%s223 + $0x58] sm:$0xff]
        %v239 = vld [vmem:[%s223 + $0x60] sm:$0xff]
        %v240 = vld [vmem:[%s223 + $0x68] sm:$0xff]
        %v241 = vld [vmem:[%s223 + $0x70] sm:$0xff]
        %v242 = vld [vmem:[%s223 + $0x78] sm:$0xff]
        %v243 = vld [vmem:[%s223 + $0x80] sm:$0xff]
        %v244 = vld [vmem:[%s223 + $0x88] sm:$0xff]
        %v245 = vld [vmem:[%s223 + $0x90] sm:$0xff]
        %v246 = vld [vmem:[%s223 + $0x98] sm:$0xff]
        %v247 = vld [vmem:[%s223 + $0xa0] sm:$0xff]
        %v248 = vld [vmem:[%s223 + $0xa8] sm:$0xff]
        %v249 = vld [vmem:[%s223 + $0xb0] sm:$0xff]
        %v250 = vld [vmem:[%s223 + $0xb8] sm:$0xff]
        %v251 = vld [vmem:[%s223 + $0xc0] sm:$0xff]
        %v252 = vld [vmem:[%s223 + $0xc8] sm:$0xff]
        %v253 = vld [vmem:[%s223 + $0xd0] sm:$0xff]
        %v254 = vld [vmem:[%s223 + $0xd8] sm:$0xff]
        %v255 = vld [vmem:[%s223 + $0xe0] sm:$0xff]
        %v256 = vld [vmem:[%s223 + $0xe8] sm:$0xff]
        %v257 = vld [vmem:[%s223 + $0xf0] sm:$0xff]
        %v258 = vld [vmem:[%s223 + $0xf8] sm:$0xff]
        %v259 = vpack.c.bf16 %v228, %v227
        %v260 = vpack.c.bf16 %v230, %v229
        %v261 = vpack.c.bf16 %v232, %v231
        %v262 = vpack.c.bf16 %v234, %v233
        %v263 = vpack.c.bf16 %v236, %v235
        %v264 = vpack.c.bf16 %v238, %v237
        %v265 = vpack.c.bf16 %v240, %v239
        %v266 = vpack.c.bf16 %v242, %v241
        %v267 = vpack.c.bf16 %v244, %v243
        %v268 = vpack.c.bf16 %v246, %v245
        %v269 = vpack.c.bf16 %v248, %v247
        %v270 = vpack.c.bf16 %v250, %v249
        %v271 = vpack.c.bf16 %v252, %v251
        %v272 = vpack.c.bf16 %v254, %v253
        %v273 = vpack.c.bf16 %v256, %v255
        %v274 = vpack.c.bf16 %v258, %v257
        %v275 = vld [vmem:[%s1] sm:$0xf]
        %v276 = vld [vmem:[%s1 + $0x4] sm:$0xf]
        %v277 = vld [vmem:[%s1 + $0x8] sm:$0xf]
        %v278 = vld [vmem:[%s1 + $0xc] sm:$0xf]
        %v279 = vld [vmem:[%s2] sm:$0x1]
        %v281 = vlaneseq
        %v282 = vshrl.u32 %v281, 7
        %v283 = vsub.s32 0, %v282
        %v284 = vrot.slane %v279, %v283
        %v290 = vunpack.c.l.b16 %v275
        %v291 = vunpack.c.l.b16 %v276
        %v292 = vunpack.c.l.b16 %v277
        %v293 = vunpack.c.l.b16 %v278
        %v294 = vpack.c.b16 %v291, %v290
        %v295 = vpack.c.b16 %v293, %v292
        %vm298 = vcmask 261120
        %v300 = vsel %vm298, %v259, 0
        %v303 = vsel %vm298, %v260, 0
        %v306 = vsel %vm298, %v261, 0
        %v309 = vsel %vm298, %v262, 0
        %v312 = vsel %vm298, %v263, 0
        %v315 = vsel %vm298, %v264, 0
        %v318 = vsel %vm298, %v265, 0
        %v321 = vsel %vm298, %v266, 0
        %v324 = vsel %vm298, %v267, 0
        %v327 = vsel %vm298, %v268, 0
        %v330 = vsel %vm298, %v269, 0
        %v333 = vsel %vm298, %v270, 0
        %v336 = vsel %vm298, %v271, 0
        %v339 = vsel %vm298, %v272, 0
        %v342 = vsel %vm298, %v273, 0
        %v345 = vsel %vm298, %v274, 0
        %347 = vmatprep.subr.bf16.mxu0 0
        %348 = vmatpush1.bf16.msra.mxu0 0
        %349 = vmatprep.subr.bf16.mxu0 0
        %350 = vmatpush1.bf16.msra.mxu0 0
        %351 = vmatprep.subr.bf16.mxu0 0
        %352 = vmatpush1.bf16.msra.mxu0 0
        %353 = vmatprep.subr.bf16.mxu0 0
        %354 = vmatpush1.bf16.msra.mxu0 0
        %355 = vmatprep.subr.bf16.mxu0 0
        %356 = vmatpush1.bf16.msra.mxu0 0
        %357 = vmatprep.subr.bf16.mxu0 0
        %358 = vmatpush1.bf16.msra.mxu0 0
        %359 = vmatprep.subr.bf16.mxu0 0
        %360 = vmatpush1.bf16.msra.mxu0 %v295
        %361 = vmatprep.subr.bf16.mxu0 0
        %362 = vmatpush1.bf16.msra.mxu0 %v294
        %363 = vmatprep.subr.bf16.mxu0 0
        %364 = vmatpush2.bf16.msra.mxu0 0
        %365 = vmatprep.subr.bf16.mxu0 0
        %366 = vmatpush2.bf16.msra.mxu0 0
        %367 = vmatprep.subr.bf16.mxu0 0
        %368 = vmatpush2.bf16.msra.mxu0 0
        %369 = vmatprep.subr.bf16.mxu0 0
        %370 = vmatpush2.bf16.msra.mxu0 0
        %371 = vmatprep.subr.bf16.mxu0 0
        %372 = vmatpush2.bf16.msra.mxu0 0
        %373 = vmatprep.subr.bf16.mxu0 0
        %374 = vmatpush2.bf16.msra.mxu0 0
        %375 = vmatprep.subr.bf16.mxu0 0
        %376 = vmatpush2.bf16.msra.mxu0 0
        %377 = vmatprep.subr.bf16.mxu0 0
        %378 = vmatpush2.bf16.msra.mxu0 0
        %379 = vmatprep.mubr.bf16.mxu0 0
        %380 = vmatmul.mubr.bf16.gmra.mxu0 %v300
        %v381 = vpop.f32.mrf.mxu0
        %v382 = vadd.f32 %v284, %v381
        %v383 = vpop.f32.mrf.mxu0
        %v384 = vpop.f32.mrf.mxu0
        %v385 = vadd.f32 %v284, %v384
        %v386 = vpop.f32.mrf.mxu0
        %387 = vmatprep.mubr.bf16.mxu0 0
        %388 = vmatmul.mubr.bf16.gmra.mxu0 %v303
        %v389 = vpop.f32.mrf.mxu0
        %v390 = vadd.f32 %v284, %v389
        %v391 = vpop.f32.mrf.mxu0
        %v392 = vpop.f32.mrf.mxu0
        %v393 = vadd.f32 %v284, %v392
        %v394 = vpop.f32.mrf.mxu0
        %395 = vmatprep.mubr.bf16.mxu0 0
        %396 = vmatmul.mubr.bf16.gmra.mxu0 %v306
        %v397 = vpop.f32.mrf.mxu0
        %v398 = vadd.f32 %v284, %v397
        %v399 = vpop.f32.mrf.mxu0
        %v400 = vpop.f32.mrf.mxu0
        %v401 = vadd.f32 %v284, %v400
        %v402 = vpop.f32.mrf.mxu0
        %403 = vmatprep.mubr.bf16.mxu0 0
        %404 = vmatmul.mubr.bf16.gmra.mxu0 %v309
        %v405 = vpop.f32.mrf.mxu0
        %v406 = vadd.f32 %v284, %v405
        %v407 = vpop.f32.mrf.mxu0
        %v408 = vpop.f32.mrf.mxu0
        %v409 = vadd.f32 %v284, %v408
        %v410 = vpop.f32.mrf.mxu0
        %411 = vmatprep.mubr.bf16.mxu0 0
        %412 = vmatmul.mubr.bf16.gmra.mxu0 %v312
        %v413 = vpop.f32.mrf.mxu0
        %v414 = vadd.f32 %v284, %v413
        %v415 = vpop.f32.mrf.mxu0
        %v416 = vpop.f32.mrf.mxu0
        %v417 = vadd.f32 %v284, %v416
        %v418 = vpop.f32.mrf.mxu0
        %419 = vmatprep.mubr.bf16.mxu0 0
        %420 = vmatmul.mubr.bf16.gmra.mxu0 %v315
        %v421 = vpop.f32.mrf.mxu0
        %v422 = vadd.f32 %v284, %v421
        %v423 = vpop.f32.mrf.mxu0
        %v424 = vpop.f32.mrf.mxu0
        %v425 = vadd.f32 %v284, %v424
        %v426 = vpop.f32.mrf.mxu0
        %427 = vmatprep.mubr.bf16.mxu0 0
        %428 = vmatmul.mubr.bf16.gmra.mxu0 %v318
        %v429 = vpop.f32.mrf.mxu0
        %v430 = vadd.f32 %v284, %v429
        %v431 = vpop.f32.mrf.mxu0
        %v432 = vpop.f32.mrf.mxu0
        %v433 = vadd.f32 %v284, %v432
        %v434 = vpop.f32.mrf.mxu0
        %435 = vmatprep.mubr.bf16.mxu0 0
        %436 = vmatmul.mubr.bf16.gmra.mxu0 %v321
        %v437 = vpop.f32.mrf.mxu0
        %v438 = vadd.f32 %v284, %v437
        %v439 = vpop.f32.mrf.mxu0
        %v440 = vpop.f32.mrf.mxu0
        %v441 = vadd.f32 %v284, %v440
        %v442 = vpop.f32.mrf.mxu0
        %443 = vmatprep.mubr.bf16.mxu0 0
        %444 = vmatmul.mubr.bf16.gmra.mxu0 %v324
        %v445 = vpop.f32.mrf.mxu0
        %v446 = vadd.f32 %v284, %v445
        %v447 = vpop.f32.mrf.mxu0
        %v448 = vpop.f32.mrf.mxu0
        %v449 = vadd.f32 %v284, %v448
        %v450 = vpop.f32.mrf.mxu0
        %451 = vmatprep.mubr.bf16.mxu0 0
        %452 = vmatmul.mubr.bf16.gmra.mxu0 %v327
        %v453 = vpop.f32.mrf.mxu0
        %v454 = vadd.f32 %v284, %v453
        %v455 = vpop.f32.mrf.mxu0
        %v456 = vpop.f32.mrf.mxu0
        %v457 = vadd.f32 %v284, %v456
        %v458 = vpop.f32.mrf.mxu0
        %459 = vmatprep.mubr.bf16.mxu0 0
        %460 = vmatmul.mubr.bf16.gmra.mxu0 %v330
        %v461 = vpop.f32.mrf.mxu0
        %v462 = vadd.f32 %v284, %v461
        %v463 = vpop.f32.mrf.mxu0
        %v464 = vpop.f32.mrf.mxu0
        %v465 = vadd.f32 %v284, %v464
        %v466 = vpop.f32.mrf.mxu0
        %467 = vmatprep.mubr.bf16.mxu0 0
        %468 = vmatmul.mubr.bf16.gmra.mxu0 %v333
        %v469 = vpop.f32.mrf.mxu0
        %v470 = vadd.f32 %v284, %v469
        %v471 = vpop.f32.mrf.mxu0
        %v472 = vpop.f32.mrf.mxu0
        %v473 = vadd.f32 %v284, %v472
        %v474 = vpop.f32.mrf.mxu0
        %475 = vmatprep.mubr.bf16.mxu0 0
        %476 = vmatmul.mubr.bf16.gmra.mxu0 %v336
        %v477 = vpop.f32.mrf.mxu0
        %v478 = vadd.f32 %v284, %v477
        %v479 = vpop.f32.mrf.mxu0
        %v480 = vpop.f32.mrf.mxu0
        %v481 = vadd.f32 %v284, %v480
        %v482 = vpop.f32.mrf.mxu0
        %483 = vmatprep.mubr.bf16.mxu0 0
        %484 = vmatmul.mubr.bf16.gmra.mxu0 %v339
        %v485 = vpop.f32.mrf.mxu0
        %v486 = vadd.f32 %v284, %v485
        %v487 = vpop.f32.mrf.mxu0
        %v488 = vpop.f32.mrf.mxu0
        %v489 = vadd.f32 %v284, %v488
        %v490 = vpop.f32.mrf.mxu0
        %491 = vmatprep.mubr.bf16.mxu0 0
        %492 = vmatmul.mubr.bf16.gmra.mxu0 %v342
        %v493 = vpop.f32.mrf.mxu0
        %v494 = vadd.f32 %v284, %v493
        %v495 = vpop.f32.mrf.mxu0
        %v496 = vpop.f32.mrf.mxu0
        %v497 = vadd.f32 %v284, %v496
        %v498 = vpop.f32.mrf.mxu0
        %499 = vmatprep.mubr.bf16.mxu0 0
        %500 = vmatmul.mubr.bf16.gmra.mxu0 %v345
        %v501 = vpop.f32.mrf.mxu0
        %v502 = vadd.f32 %v284, %v501
        %v503 = vpop.f32.mrf.mxu0
        %v504 = vpop.f32.mrf.mxu0
        %v505 = vadd.f32 %v284, %v504
        %v506 = vpop.f32.mrf.mxu0
        %507 = vdwg.mxu0
        %v508 = vmax.f32 %v382, 0.0
        %v509 = vmax.f32 %v385, 0.0
        %v510 = vmax.f32 %v390, 0.0
        %v511 = vmax.f32 %v393, 0.0
        %v512 = vmax.f32 %v398, 0.0
        %v513 = vmax.f32 %v401, 0.0
        %v514 = vmax.f32 %v406, 0.0
        %v515 = vmax.f32 %v409, 0.0
        %v516 = vmax.f32 %v414, 0.0
        %v517 = vmax.f32 %v417, 0.0
        %v518 = vmax.f32 %v422, 0.0
        %v519 = vmax.f32 %v425, 0.0
        %v520 = vmax.f32 %v430, 0.0
        %v521 = vmax.f32 %v433, 0.0
        %v522 = vmax.f32 %v438, 0.0
        %v523 = vmax.f32 %v441, 0.0
        %v524 = vmax.f32 %v446, 0.0
        %v525 = vmax.f32 %v449, 0.0
        %v526 = vmax.f32 %v454, 0.0
        %v527 = vmax.f32 %v457, 0.0
        %v528 = vmax.f32 %v462, 0.0
        %v529 = vmax.f32 %v465, 0.0
        %v530 = vmax.f32 %v470, 0.0
        %v531 = vmax.f32 %v473, 0.0
        %v532 = vmax.f32 %v478, 0.0
        %v533 = vmax.f32 %v481, 0.0
        %v534 = vmax.f32 %v486, 0.0
        %v535 = vmax.f32 %v489, 0.0
        %v536 = vmax.f32 %v494, 0.0
        %v537 = vmax.f32 %v497, 0.0
        %v538 = vmax.f32 %v502, 0.0
        %v539 = vmax.f32 %v505, 0.0
        %v540 = vpack.c.bf16 %v509, %v508
        %v541 = vpack.c.bf16 %v511, %v510
        %v542 = vpack.c.bf16 %v513, %v512
        %v543 = vpack.c.bf16 %v515, %v514
        %v544 = vpack.c.bf16 %v517, %v516
        %v545 = vpack.c.bf16 %v519, %v518
        %v546 = vpack.c.bf16 %v521, %v520
        %v547 = vpack.c.bf16 %v523, %v522
        %v548 = vpack.c.bf16 %v525, %v524
        %v549 = vpack.c.bf16 %v527, %v526
        %v550 = vpack.c.bf16 %v529, %v528
        %v551 = vpack.c.bf16 %v531, %v530
        %v552 = vpack.c.bf16 %v533, %v532
        %v553 = vpack.c.bf16 %v535, %v534
        %v554 = vpack.c.bf16 %v537, %v536
        %v555 = vpack.c.bf16 %v539, %v538
        %v556 = vld [vmem:[%s3] sm:$0xff]
        %v557 = vld [vmem:[%s3 + $0x8] sm:$0xff]
        %v558 = vld [vmem:[%s3 + $0x10] sm:$0xff]
        %v559 = vld [vmem:[%s3 + $0x18] sm:$0xff]
        %v560 = vld [vmem:[%s3 + $0x20] sm:$0xff]
        %v561 = vld [vmem:[%s3 + $0x28] sm:$0xff]
        %v562 = vld [vmem:[%s3 + $0x30] sm:$0xff]
        %v563 = vld [vmem:[%s3 + $0x38] sm:$0xff]
        %v564 = vld [vmem:[%s4] sm:$0x3]
        %v566 = vlaneseq
        %v567 = vshrl.u32 %v566, 7
        %v568 = vsub.s32 0, %v567
        %v569 = vrot.slane %v564, %v568
        %v570 = vlaneseq
        %v571 = vshrl.u32 %v570, 7
        %v572 = vsub.s32 1, %v571
        %v573 = vrot.slane %v564, %v572
        %v584 = vunpack.c.l.b16 %v556
        %v585 = vunpack.c.h.b16 %v556
        %v586 = vunpack.c.l.b16 %v557
        %v587 = vunpack.c.h.b16 %v557
        %v588 = vunpack.c.l.b16 %v558
        %v589 = vunpack.c.h.b16 %v558
        %v590 = vunpack.c.l.b16 %v559
        %v591 = vunpack.c.h.b16 %v559
        %v592 = vunpack.c.l.b16 %v560
        %v593 = vunpack.c.h.b16 %v560
        %v594 = vunpack.c.l.b16 %v561
        %v595 = vunpack.c.h.b16 %v561
        %v596 = vunpack.c.l.b16 %v562
        %v597 = vunpack.c.h.b16 %v562
        %v598 = vunpack.c.l.b16 %v563
        %v599 = vunpack.c.h.b16 %v563
        %v600 = vpack.c.b16 %v586, %v584
        %v601 = vpack.c.b16 %v587, %v585
        %v602 = vpack.c.b16 %v590, %v588
        %v603 = vpack.c.b16 %v591, %v589
        %v604 = vpack.c.b16 %v594, %v592
        %v605 = vpack.c.b16 %v595, %v593
        %v606 = vpack.c.b16 %v598, %v596
        %v607 = vpack.c.b16 %v599, %v597
        %vm616 = vcmask 523264
        %v618 = vsel %vm616, %v540, 0
        %v621 = vsel %vm616, %v541, 0
        %v624 = vsel %vm616, %v542, 0
        %v627 = vsel %vm616, %v543, 0
        %v630 = vsel %vm616, %v544, 0
        %v633 = vsel %vm616, %v545, 0
        %v636 = vsel %vm616, %v546, 0
        %v639 = vsel %vm616, %v547, 0
        %v642 = vsel %vm616, %v548, 0
        %v645 = vsel %vm616, %v549, 0
        %v648 = vsel %vm616, %v550, 0
        %v651 = vsel %vm616, %v551, 0
        %v654 = vsel %vm616, %v552, 0
        %v657 = vsel %vm616, %v553, 0
        %v660 = vsel %vm616, %v554, 0
        %v663 = vsel %vm616, %v555, 0
        %665 = vmatprep.subr.bf16.mxu0 0
        %666 = vmatpush1.bf16.msra.mxu0 0
        %667 = vmatprep.subr.bf16.mxu0 0
        %668 = vmatpush1.bf16.msra.mxu0 0
        %669 = vmatprep.subr.bf16.mxu0 0
        %670 = vmatpush1.bf16.msra.mxu0 0
        %671 = vmatprep.subr.bf16.mxu0 0
        %672 = vmatpush1.bf16.msra.mxu0 0
        %673 = vmatprep.subr.bf16.mxu0 %v607
        %674 = vmatpush1.bf16.msra.mxu0 %v606
        %675 = vmatprep.subr.bf16.mxu0 %v605
        %676 = vmatpush1.bf16.msra.mxu0 %v604
        %677 = vmatprep.subr.bf16.mxu0 %v603
        %678 = vmatpush1.bf16.msra.mxu0 %v602
        %679 = vmatprep.subr.bf16.mxu0 %v601
        %680 = vmatpush1.bf16.msra.mxu0 %v600
        %681 = vmatprep.subr.bf16.mxu0 0
        %682 = vmatpush2.bf16.msra.mxu0 0
        %683 = vmatprep.subr.bf16.mxu0 0
        %684 = vmatpush2.bf16.msra.mxu0 0
        %685 = vmatprep.subr.bf16.mxu0 0
        %686 = vmatpush2.bf16.msra.mxu0 0
        %687 = vmatprep.subr.bf16.mxu0 0
        %688 = vmatpush2.bf16.msra.mxu0 0
        %689 = vmatprep.subr.bf16.mxu0 0
        %690 = vmatpush2.bf16.msra.mxu0 0
        %691 = vmatprep.subr.bf16.mxu0 0
        %692 = vmatpush2.bf16.msra.mxu0 0
        %693 = vmatprep.subr.bf16.mxu0 0
        %694 = vmatpush2.bf16.msra.mxu0 0
        %695 = vmatprep.subr.bf16.mxu0 0
        %696 = vmatpush2.bf16.msra.mxu0 0
        %697 = vmatprep.mubr.bf16.mxu0 0
        %698 = vmatmul.mubr.bf16.gmra.mxu0 %v618
        %v699 = vpop.f32.mrf.mxu0
        %v700 = vadd.f32 %v569, %v699
        %v701 = vpop.f32.mrf.mxu0
        %v702 = vadd.f32 %v573, %v701
        %v703 = vpop.f32.mrf.mxu0
        %v704 = vadd.f32 %v569, %v703
        %v705 = vpop.f32.mrf.mxu0
        %v706 = vadd.f32 %v573, %v705
        %707 = vmatprep.mubr.bf16.mxu0 0
        %708 = vmatmul.mubr.bf16.gmra.mxu0 %v621
        %v709 = vpop.f32.mrf.mxu0
        %v710 = vadd.f32 %v569, %v709
        %v711 = vpop.f32.mrf.mxu0
        %v712 = vadd.f32 %v573, %v711
        %v713 = vpop.f32.mrf.mxu0
        %v714 = vadd.f32 %v569, %v713
        %v715 = vpop.f32.mrf.mxu0
        %v716 = vadd.f32 %v573, %v715
        %717 = vmatprep.mubr.bf16.mxu0 0
        %718 = vmatmul.mubr.bf16.gmra.mxu0 %v624
        %v719 = vpop.f32.mrf.mxu0
        %v720 = vadd.f32 %v569, %v719
        %v721 = vpop.f32.mrf.mxu0
        %v722 = vadd.f32 %v573, %v721
        %v723 = vpop.f32.mrf.mxu0
        %v724 = vadd.f32 %v569, %v723
        %v725 = vpop.f32.mrf.mxu0
        %v726 = vadd.f32 %v573, %v725
        %727 = vmatprep.mubr.bf16.mxu0 0
        %728 = vmatmul.mubr.bf16.gmra.mxu0 %v627
        %v729 = vpop.f32.mrf.mxu0
        %v730 = vadd.f32 %v569, %v729
        %v731 = vpop.f32.mrf.mxu0
        %v732 = vadd.f32 %v573, %v731
        %v733 = vpop.f32.mrf.mxu0
        %v734 = vadd.f32 %v569, %v733
        %v735 = vpop.f32.mrf.mxu0
        %v736 = vadd.f32 %v573, %v735
        %737 = vmatprep.mubr.bf16.mxu0 0
        %738 = vmatmul.mubr.bf16.gmra.mxu0 %v630
        %v739 = vpop.f32.mrf.mxu0
        %v740 = vadd.f32 %v569, %v739
        %v741 = vpop.f32.mrf.mxu0
        %v742 = vadd.f32 %v573, %v741
        %v743 = vpop.f32.mrf.mxu0
        %v744 = vadd.f32 %v569, %v743
        %v745 = vpop.f32.mrf.mxu0
        %v746 = vadd.f32 %v573, %v745
        %747 = vmatprep.mubr.bf16.mxu0 0
        %748 = vmatmul.mubr.bf16.gmra.mxu0 %v633
        %v749 = vpop.f32.mrf.mxu0
        %v750 = vadd.f32 %v569, %v749
        %v751 = vpop.f32.mrf.mxu0
        %v752 = vadd.f32 %v573, %v751
        %v753 = vpop.f32.mrf.mxu0
        %v754 = vadd.f32 %v569, %v753
        %v755 = vpop.f32.mrf.mxu0
        %v756 = vadd.f32 %v573, %v755
        %757 = vmatprep.mubr.bf16.mxu0 0
        %758 = vmatmul.mubr.bf16.gmra.mxu0 %v636
        %v759 = vpop.f32.mrf.mxu0
        %v760 = vadd.f32 %v569, %v759
        %v761 = vpop.f32.mrf.mxu0
        %v762 = vadd.f32 %v573, %v761
        %v763 = vpop.f32.mrf.mxu0
        %v764 = vadd.f32 %v569, %v763
        %v765 = vpop.f32.mrf.mxu0
        %v766 = vadd.f32 %v573, %v765
        %767 = vmatprep.mubr.bf16.mxu0 0
        %768 = vmatmul.mubr.bf16.gmra.mxu0 %v639
        %v769 = vpop.f32.mrf.mxu0
        %v770 = vadd.f32 %v569, %v769
        %v771 = vpop.f32.mrf.mxu0
        %v772 = vadd.f32 %v573, %v771
        %v773 = vpop.f32.mrf.mxu0
        %v774 = vadd.f32 %v569, %v773
        %v775 = vpop.f32.mrf.mxu0
        %v776 = vadd.f32 %v573, %v775
        %777 = vmatprep.mubr.bf16.mxu0 0
        %778 = vmatmul.mubr.bf16.gmra.mxu0 %v642
        %v779 = vpop.f32.mrf.mxu0
        %v780 = vadd.f32 %v569, %v779
        %v781 = vpop.f32.mrf.mxu0
        %v782 = vadd.f32 %v573, %v781
        %v783 = vpop.f32.mrf.mxu0
        %v784 = vadd.f32 %v569, %v783
        %v785 = vpop.f32.mrf.mxu0
        %v786 = vadd.f32 %v573, %v785
        %787 = vmatprep.mubr.bf16.mxu0 0
        %788 = vmatmul.mubr.bf16.gmra.mxu0 %v645
        %v789 = vpop.f32.mrf.mxu0
        %v790 = vadd.f32 %v569, %v789
        %v791 = vpop.f32.mrf.mxu0
        %v792 = vadd.f32 %v573, %v791
        %v793 = vpop.f32.mrf.mxu0
        %v794 = vadd.f32 %v569, %v793
        %v795 = vpop.f32.mrf.mxu0
        %v796 = vadd.f32 %v573, %v795
        %797 = vmatprep.mubr.bf16.mxu0 0
        %798 = vmatmul.mubr.bf16.gmra.mxu0 %v648
        %v799 = vpop.f32.mrf.mxu0
        %v800 = vadd.f32 %v569, %v799
        %v801 = vpop.f32.mrf.mxu0
        %v802 = vadd.f32 %v573, %v801
        %v803 = vpop.f32.mrf.mxu0
        %v804 = vadd.f32 %v569, %v803
        %v805 = vpop.f32.mrf.mxu0
        %v806 = vadd.f32 %v573, %v805
        %807 = vmatprep.mubr.bf16.mxu0 0
        %808 = vmatmul.mubr.bf16.gmra.mxu0 %v651
        %v809 = vpop.f32.mrf.mxu0
        %v810 = vadd.f32 %v569, %v809
        %v811 = vpop.f32.mrf.mxu0
        %v812 = vadd.f32 %v573, %v811
        %v813 = vpop.f32.mrf.mxu0
        %v814 = vadd.f32 %v569, %v813
        %v815 = vpop.f32.mrf.mxu0
        %v816 = vadd.f32 %v573, %v815
        %817 = vmatprep.mubr.bf16.mxu0 0
        %818 = vmatmul.mubr.bf16.gmra.mxu0 %v654
        %v819 = vpop.f32.mrf.mxu0
        %v820 = vadd.f32 %v569, %v819
        %v821 = vpop.f32.mrf.mxu0
        %v822 = vadd.f32 %v573, %v821
        %v823 = vpop.f32.mrf.mxu0
        %v824 = vadd.f32 %v569, %v823
        %v825 = vpop.f32.mrf.mxu0
        %v826 = vadd.f32 %v573, %v825
        %827 = vmatprep.mubr.bf16.mxu0 0
        %828 = vmatmul.mubr.bf16.gmra.mxu0 %v657
        %v829 = vpop.f32.mrf.mxu0
        %v830 = vadd.f32 %v569, %v829
        %v831 = vpop.f32.mrf.mxu0
        %v832 = vadd.f32 %v573, %v831
        %v833 = vpop.f32.mrf.mxu0
        %v834 = vadd.f32 %v569, %v833
        %v835 = vpop.f32.mrf.mxu0
        %v836 = vadd.f32 %v573, %v835
        %837 = vmatprep.mubr.bf16.mxu0 0
        %838 = vmatmul.mubr.bf16.gmra.mxu0 %v660
        %v839 = vpop.f32.mrf.mxu0
        %v840 = vadd.f32 %v569, %v839
        %v841 = vpop.f32.mrf.mxu0
        %v842 = vadd.f32 %v573, %v841
        %v843 = vpop.f32.mrf.mxu0
        %v844 = vadd.f32 %v569, %v843
        %v845 = vpop.f32.mrf.mxu0
        %v846 = vadd.f32 %v573, %v845
        %847 = vmatprep.mubr.bf16.mxu0 0
        %848 = vmatmul.mubr.bf16.gmra.mxu0 %v663
        %v849 = vpop.f32.mrf.mxu0
        %v850 = vadd.f32 %v569, %v849
        %v851 = vpop.f32.mrf.mxu0
        %v852 = vadd.f32 %v573, %v851
        %v853 = vpop.f32.mrf.mxu0
        %v854 = vadd.f32 %v569, %v853
        %v855 = vpop.f32.mrf.mxu0
        %v856 = vadd.f32 %v573, %v855
        %857 = vdwg.mxu0
        %v858 = vsub.f32 0.0, %v700
        %v859 = vsub.f32 0.0, %v702
        %v860 = vsub.f32 0.0, %v704
        %v861 = vsub.f32 0.0, %v706
        %v862 = vsub.f32 0.0, %v710
        %v863 = vsub.f32 0.0, %v712
        %v864 = vsub.f32 0.0, %v714
        %v865 = vsub.f32 0.0, %v716
        %v866 = vsub.f32 0.0, %v720
        %v867 = vsub.f32 0.0, %v722
        %v868 = vsub.f32 0.0, %v724
        %v869 = vsub.f32 0.0, %v726
        %v870 = vsub.f32 0.0, %v730
        %v871 = vsub.f32 0.0, %v732
        %v872 = vsub.f32 0.0, %v734
        %v873 = vsub.f32 0.0, %v736
        %v874 = vsub.f32 0.0, %v740
        %v875 = vsub.f32 0.0, %v742
        %v876 = vsub.f32 0.0, %v744
        %v877 = vsub.f32 0.0, %v746
        %v878 = vsub.f32 0.0, %v750
        %v879 = vsub.f32 0.0, %v752
        %v880 = vsub.f32 0.0, %v754
        %v881 = vsub.f32 0.0, %v756
        %v882 = vsub.f32 0.0, %v760
        %v883 = vsub.f32 0.0, %v762
        %v884 = vsub.f32 0.0, %v764
        %v885 = vsub.f32 0.0, %v766
        %v886 = vsub.f32 0.0, %v770
        %v887 = vsub.f32 0.0, %v772
        %v888 = vsub.f32 0.0, %v774
        %v889 = vsub.f32 0.0, %v776
        %v890 = vsub.f32 0.0, %v780
        %v891 = vsub.f32 0.0, %v782
        %v892 = vsub.f32 0.0, %v784
        %v893 = vsub.f32 0.0, %v786
        %v894 = vsub.f32 0.0, %v790
        %v895 = vsub.f32 0.0, %v792
        %v896 = vsub.f32 0.0, %v794
        %v897 = vsub.f32 0.0, %v796
        %v898 = vsub.f32 0.0, %v800
        %v899 = vsub.f32 0.0, %v802
        %v900 = vsub.f32 0.0, %v804
        %v901 = vsub.f32 0.0, %v806
        %v902 = vsub.f32 0.0, %v810
        %v903 = vsub.f32 0.0, %v812
        %v904 = vsub.f32 0.0, %v814
        %v905 = vsub.f32 0.0, %v816
        %v906 = vsub.f32 0.0, %v820
        %v907 = vsub.f32 0.0, %v822
        %v908 = vsub.f32 0.0, %v824
        %v909 = vsub.f32 0.0, %v826
        %v910 = vsub.f32 0.0, %v830
        %v911 = vsub.f32 0.0, %v832
        %v912 = vsub.f32 0.0, %v834
        %v913 = vsub.f32 0.0, %v836
        %v914 = vsub.f32 0.0, %v840
        %v915 = vsub.f32 0.0, %v842
        %v916 = vsub.f32 0.0, %v844
        %v917 = vsub.f32 0.0, %v846
        %v918 = vsub.f32 0.0, %v850
        %v919 = vsub.f32 0.0, %v852
        %v920 = vsub.f32 0.0, %v854
        %v921 = vsub.f32 0.0, %v856
        %v922 = vmul.f32 %v858, 1.442695
        %v923 = vpow.pop %v922
        %v924 = vmul.f32 %v859, 1.442695
        %v925 = vpow.pop %v924
        %v926 = vmul.f32 %v860, 1.442695
        %v927 = vpow.pop %v926
        %v928 = vmul.f32 %v861, 1.442695
        %v929 = vpow.pop %v928
        %v930 = vmul.f32 %v862, 1.442695
        %v931 = vpow.pop %v930
        %v932 = vmul.f32 %v863, 1.442695
        %v933 = vpow.pop %v932
        %v934 = vmul.f32 %v864, 1.442695
        %v935 = vpow.pop %v934
        %v936 = vmul.f32 %v865, 1.442695
        %v937 = vpow.pop %v936
        %v938 = vmul.f32 %v866, 1.442695
        %v939 = vpow.pop %v938
        %v940 = vmul.f32 %v867, 1.442695
        %v941 = vpow.pop %v940
        %v942 = vmul.f32 %v868, 1.442695
        %v943 = vpow.pop %v942
        %v944 = vmul.f32 %v869, 1.442695
        %v945 = vpow.pop %v944
        %v946 = vmul.f32 %v870, 1.442695
        %v947 = vpow.pop %v946
        %v948 = vmul.f32 %v871, 1.442695
        %v949 = vpow.pop %v948
        %v950 = vmul.f32 %v872, 1.442695
        %v951 = vpow.pop %v950
        %v952 = vmul.f32 %v873, 1.442695
        %v953 = vpow.pop %v952
        %v954 = vmul.f32 %v874, 1.442695
        %v955 = vpow.pop %v954
        %v956 = vmul.f32 %v875, 1.442695
        %v957 = vpow.pop %v956
        %v958 = vmul.f32 %v876, 1.442695
        %v959 = vpow.pop %v958
        %v960 = vmul.f32 %v877, 1.442695
        %v961 = vpow.pop %v960
        %v962 = vmul.f32 %v878, 1.442695
        %v963 = vpow.pop %v962
        %v964 = vmul.f32 %v879, 1.442695
        %v965 = vpow.pop %v964
        %v966 = vmul.f32 %v880, 1.442695
        %v967 = vpow.pop %v966
        %v968 = vmul.f32 %v881, 1.442695
        %v969 = vpow.pop %v968
        %v970 = vmul.f32 %v882, 1.442695
        %v971 = vpow.pop %v970
        %v972 = vmul.f32 %v883, 1.442695
        %v973 = vpow.pop %v972
        %v974 = vmul.f32 %v884, 1.442695
        %v975 = vpow.pop %v974
        %v976 = vmul.f32 %v885, 1.442695
        %v977 = vpow.pop %v976
        %v978 = vmul.f32 %v886, 1.442695
        %v979 = vpow.pop %v978
        %v980 = vmul.f32 %v887, 1.442695
        %v981 = vpow.pop %v980
        %v982 = vmul.f32 %v888, 1.442695
        %v983 = vpow.pop %v982
        %v984 = vmul.f32 %v889, 1.442695
        %v985 = vpow.pop %v984
        %v986 = vmul.f32 %v890, 1.442695
        %v987 = vpow.pop %v986
        %v988 = vmul.f32 %v891, 1.442695
        %v989 = vpow.pop %v988
        %v990 = vmul.f32 %v892, 1.442695
        %v991 = vpow.pop %v990
        %v992 = vmul.f32 %v893, 1.442695
        %v993 = vpow.pop %v992
        %v994 = vmul.f32 %v894, 1.442695
        %v995 = vpow.pop %v994
        %v996 = vmul.f32 %v895, 1.442695
        %v997 = vpow.pop %v996
        %v998 = vmul.f32 %v896, 1.442695
        %v999 = vpow.pop %v998
        %v1000 = vmul.f32 %v897, 1.442695
        %v1001 = vpow.pop %v1000
        %v1002 = vmul.f32 %v898, 1.442695
        %v1003 = vpow.pop %v1002
        %v1004 = vmul.f32 %v899, 1.442695
        %v1005 = vpow.pop %v1004
        %v1006 = vmul.f32 %v900, 1.442695
        %v1007 = vpow.pop %v1006
        %v1008 = vmul.f32 %v901, 1.442695
        %v1009 = vpow.pop %v1008
        %v1010 = vmul.f32 %v902, 1.442695
        %v1011 = vpow.pop %v1010
        %v1012 = vmul.f32 %v903, 1.442695
        %v1013 = vpow.pop %v1012
        %v1014 = vmul.f32 %v904, 1.442695
        %v1015 = vpow.pop %v1014
        %v1016 = vmul.f32 %v905, 1.442695
        %v1017 = vpow.pop %v1016
        %v1018 = vmul.f32 %v906, 1.442695
        %v1019 = vpow.pop %v1018
        %v1020 = vmul.f32 %v907, 1.442695
        %v1021 = vpow.pop %v1020
        %v1022 = vmul.f32 %v908, 1.442695
        %v1023 = vpow.pop %v1022
        %v1024 = vmul.f32 %v909, 1.442695
        %v1025 = vpow.pop %v1024
        %v1026 = vmul.f32 %v910, 1.442695
        %v1027 = vpow.pop %v1026
        %v1028 = vmul.f32 %v911, 1.442695
        %v1029 = vpow.pop %v1028
        %v1030 = vmul.f32 %v912, 1.442695
        %v1031 = vpow.pop %v1030
        %v1032 = vmul.f32 %v913, 1.442695
        %v1033 = vpow.pop %v1032
        %v1034 = vmul.f32 %v914, 1.442695
        %v1035 = vpow.pop %v1034
        %v1036 = vmul.f32 %v915, 1.442695
        %v1037 = vpow.pop %v1036
        %v1038 = vmul.f32 %v916, 1.442695
        %v1039 = vpow.pop %v1038
        %v1040 = vmul.f32 %v917, 1.442695
        %v1041 = vpow.pop %v1040
        %v1042 = vmul.f32 %v918, 1.442695
        %v1043 = vpow.pop %v1042
        %v1044 = vmul.f32 %v919, 1.442695
        %v1045 = vpow.pop %v1044
        %v1046 = vmul.f32 %v920, 1.442695
        %v1047 = vpow.pop %v1046
        %v1048 = vmul.f32 %v921, 1.442695
        %v1049 = vpow.pop %v1048
        %v1050 = vadd.f32 %v923, 1.0
        %v1051 = vadd.f32 %v925, 1.0
        %v1052 = vadd.f32 %v927, 1.0
        %v1053 = vadd.f32 %v929, 1.0
        %v1054 = vadd.f32 %v931, 1.0
        %v1055 = vadd.f32 %v933, 1.0
        %v1056 = vadd.f32 %v935, 1.0
        %v1057 = vadd.f32 %v937, 1.0
        %v1058 = vadd.f32 %v939, 1.0
        %v1059 = vadd.f32 %v941, 1.0
        %v1060 = vadd.f32 %v943, 1.0
        %v1061 = vadd.f32 %v945, 1.0
        %v1062 = vadd.f32 %v947, 1.0
        %v1063 = vadd.f32 %v949, 1.0
        %v1064 = vadd.f32 %v951, 1.0
        %v1065 = vadd.f32 %v953, 1.0
        %v1066 = vadd.f32 %v955, 1.0
        %v1067 = vadd.f32 %v957, 1.0
        %v1068 = vadd.f32 %v959, 1.0
        %v1069 = vadd.f32 %v961, 1.0
        %v1070 = vadd.f32 %v963, 1.0
        %v1071 = vadd.f32 %v965, 1.0
        %v1072 = vadd.f32 %v967, 1.0
        %v1073 = vadd.f32 %v969, 1.0
        %v1074 = vadd.f32 %v971, 1.0
        %v1075 = vadd.f32 %v973, 1.0
        %v1076 = vadd.f32 %v975, 1.0
        %v1077 = vadd.f32 %v977, 1.0
        %v1078 = vadd.f32 %v979, 1.0
        %v1079 = vadd.f32 %v981, 1.0
        %v1080 = vadd.f32 %v983, 1.0
        %v1081 = vadd.f32 %v985, 1.0
        %v1082 = vadd.f32 %v987, 1.0
        %v1083 = vadd.f32 %v989, 1.0
        %v1084 = vadd.f32 %v991, 1.0
        %v1085 = vadd.f32 %v993, 1.0
        %v1086 = vadd.f32 %v995, 1.0
        %v1087 = vadd.f32 %v997, 1.0
        %v1088 = vadd.f32 %v999, 1.0
        %v1089 = vadd.f32 %v1001, 1.0
        %v1090 = vadd.f32 %v1003, 1.0
        %v1091 = vadd.f32 %v1005, 1.0
        %v1092 = vadd.f32 %v1007, 1.0
        %v1093 = vadd.f32 %v1009, 1.0
        %v1094 = vadd.f32 %v1011, 1.0
        %v1095 = vadd.f32 %v1013, 1.0
        %v1096 = vadd.f32 %v1015, 1.0
        %v1097 = vadd.f32 %v1017, 1.0
        %v1098 = vadd.f32 %v1019, 1.0
        %v1099 = vadd.f32 %v1021, 1.0
        %v1100 = vadd.f32 %v1023, 1.0
        %v1101 = vadd.f32 %v1025, 1.0
        %v1102 = vadd.f32 %v1027, 1.0
        %v1103 = vadd.f32 %v1029, 1.0
        %v1104 = vadd.f32 %v1031, 1.0
        %v1105 = vadd.f32 %v1033, 1.0
        %v1106 = vadd.f32 %v1035, 1.0
        %v1107 = vadd.f32 %v1037, 1.0
        %v1108 = vadd.f32 %v1039, 1.0
        %v1109 = vadd.f32 %v1041, 1.0
        %v1110 = vadd.f32 %v1043, 1.0
        %v1111 = vadd.f32 %v1045, 1.0
        %v1112 = vadd.f32 %v1047, 1.0
        %v1113 = vadd.f32 %v1049, 1.0
        %v1114 = vrcp.pop %v1050
        %v1115 = vrcp.pop %v1051
        %v1116 = vrcp.pop %v1052
        %v1117 = vrcp.pop %v1053
        %v1118 = vrcp.pop %v1054
        %v1119 = vrcp.pop %v1055
        %v1120 = vrcp.pop %v1056
        %v1121 = vrcp.pop %v1057
        %v1122 = vrcp.pop %v1058
        %v1123 = vrcp.pop %v1059
        %v1124 = vrcp.pop %v1060
        %v1125 = vrcp.pop %v1061
        %v1126 = vrcp.pop %v1062
        %v1127 = vrcp.pop %v1063
        %v1128 = vrcp.pop %v1064
        %v1129 = vrcp.pop %v1065
        %v1130 = vrcp.pop %v1066
        %v1131 = vrcp.pop %v1067
        %v1132 = vrcp.pop %v1068
        %v1133 = vrcp.pop %v1069
        %v1134 = vrcp.pop %v1070
        %v1135 = vrcp.pop %v1071
        %v1136 = vrcp.pop %v1072
        %v1137 = vrcp.pop %v1073
        %v1138 = vrcp.pop %v1074
        %v1139 = vrcp.pop %v1075
        %v1140 = vrcp.pop %v1076
        %v1141 = vrcp.pop %v1077
        %v1142 = vrcp.pop %v1078
        %v1143 = vrcp.pop %v1079
        %v1144 = vrcp.pop %v1080
        %v1145 = vrcp.pop %v1081
        %v1146 = vrcp.pop %v1082
        %v1147 = vrcp.pop %v1083
        %v1148 = vrcp.pop %v1084
        %v1149 = vrcp.pop %v1085
        %v1150 = vrcp.pop %v1086
        %v1151 = vrcp.pop %v1087
        %v1152 = vrcp.pop %v1088
        %v1153 = vrcp.pop %v1089
        %v1154 = vrcp.pop %v1090
        %v1155 = vrcp.pop %v1091
        %v1156 = vrcp.pop %v1092
        %v1157 = vrcp.pop %v1093
        %v1158 = vrcp.pop %v1094
        %v1159 = vrcp.pop %v1095
        %v1160 = vrcp.pop %v1096
        %v1161 = vrcp.pop %v1097
        %v1162 = vrcp.pop %v1098
        %v1163 = vrcp.pop %v1099
        %v1164 = vrcp.pop %v1100
        %v1165 = vrcp.pop %v1101
        %v1166 = vrcp.pop %v1102
        %v1167 = vrcp.pop %v1103
        %v1168 = vrcp.pop %v1104
        %v1169 = vrcp.pop %v1105
        %v1170 = vrcp.pop %v1106
        %v1171 = vrcp.pop %v1107
        %v1172 = vrcp.pop %v1108
        %v1173 = vrcp.pop %v1109
        %v1174 = vrcp.pop %v1110
        %v1175 = vrcp.pop %v1111
        %v1176 = vrcp.pop %v1112
        %v1177 = vrcp.pop %v1113
        %v1178 = vpack.c.bf16 %v1116, %v1114
        %v1179 = vpack.c.bf16 %v1117, %v1115
        %v1180 = vpack.c.bf16 %v1120, %v1118
        %v1181 = vpack.c.bf16 %v1121, %v1119
        %v1182 = vpack.c.bf16 %v1124, %v1122
        %v1183 = vpack.c.bf16 %v1125, %v1123
        %v1184 = vpack.c.bf16 %v1128, %v1126
        %v1185 = vpack.c.bf16 %v1129, %v1127
        %v1186 = vpack.c.bf16 %v1132, %v1130
        %v1187 = vpack.c.bf16 %v1133, %v1131
        %v1188 = vpack.c.bf16 %v1136, %v1134
        %v1189 = vpack.c.bf16 %v1137, %v1135
        %v1190 = vpack.c.bf16 %v1140, %v1138
        %v1191 = vpack.c.bf16 %v1141, %v1139
        %v1192 = vpack.c.bf16 %v1144, %v1142
        %v1193 = vpack.c.bf16 %v1145, %v1143
        %v1194 = vpack.c.bf16 %v1148, %v1146
        %v1195 = vpack.c.bf16 %v1149, %v1147
        %v1196 = vpack.c.bf16 %v1152, %v1150
        %v1197 = vpack.c.bf16 %v1153, %v1151
        %v1198 = vpack.c.bf16 %v1156, %v1154
        %v1199 = vpack.c.bf16 %v1157, %v1155
        %v1200 = vpack.c.bf16 %v1160, %v1158
        %v1201 = vpack.c.bf16 %v1161, %v1159
        %v1202 = vpack.c.bf16 %v1164, %v1162
        %v1203 = vpack.c.bf16 %v1165, %v1163
        %v1204 = vpack.c.bf16 %v1168, %v1166
        %v1205 = vpack.c.bf16 %v1169, %v1167
        %v1206 = vpack.c.bf16 %v1172, %v1170
        %v1207 = vpack.c.bf16 %v1173, %v1171
        %v1208 = vpack.c.bf16 %v1176, %v1174
        %v1209 = vpack.c.bf16 %v1177, %v1175
        %v1242 = vunpack.c.l.b16 %v1178
        %v1243 = vunpack.c.l.b16 %v1179
        %v1244 = vunpack.c.h.b16 %v1178
        %v1245 = vunpack.c.h.b16 %v1179
        %v1246 = vunpack.c.l.b16 %v1180
        %v1247 = vunpack.c.l.b16 %v1181
        %v1248 = vunpack.c.h.b16 %v1180
        %v1249 = vunpack.c.h.b16 %v1181
        %v1250 = vunpack.c.l.b16 %v1182
        %v1251 = vunpack.c.l.b16 %v1183
        %v1252 = vunpack.c.h.b16 %v1182
        %v1253 = vunpack.c.h.b16 %v1183
        %v1254 = vunpack.c.l.b16 %v1184
        %v1255 = vunpack.c.l.b16 %v1185
        %v1256 = vunpack.c.h.b16 %v1184
        %v1257 = vunpack.c.h.b16 %v1185
        %v1258 = vunpack.c.l.b16 %v1186
        %v1259 = vunpack.c.l.b16 %v1187
        %v1260 = vunpack.c.h.b16 %v1186
        %v1261 = vunpack.c.h.b16 %v1187
        %v1262 = vunpack.c.l.b16 %v1188
        %v1263 = vunpack.c.l.b16 %v1189
        %v1264 = vunpack.c.h.b16 %v1188
        %v1265 = vunpack.c.h.b16 %v1189
        %v1266 = vunpack.c.l.b16 %v1190
        %v1267 = vunpack.c.l.b16 %v1191
        %v1268 = vunpack.c.h.b16 %v1190
        %v1269 = vunpack.c.h.b16 %v1191
        %v1270 = vunpack.c.l.b16 %v1192
        %v1271 = vunpack.c.l.b16 %v1193
        %v1272 = vunpack.c.h.b16 %v1192
        %v1273 = vunpack.c.h.b16 %v1193
        %v1274 = vunpack.c.l.b16 %v1194
        %v1275 = vunpack.c.l.b16 %v1195
        %v1276 = vunpack.c.h.b16 %v1194
        %v1277 = vunpack.c.h.b16 %v1195
        %v1278 = vunpack.c.l.b16 %v1196
        %v1279 = vunpack.c.l.b16 %v1197
        %v1280 = vunpack.c.h.b16 %v1196
        %v1281 = vunpack.c.h.b16 %v1197
        %v1282 = vunpack.c.l.b16 %v1198
        %v1283 = vunpack.c.l.b16 %v1199
        %v1284 = vunpack.c.h.b16 %v1198
        %v1285 = vunpack.c.h.b16 %v1199
        %v1286 = vunpack.c.l.b16 %v1200
        %v1287 = vunpack.c.l.b16 %v1201
        %v1288 = vunpack.c.h.b16 %v1200
        %v1289 = vunpack.c.h.b16 %v1201
        %v1290 = vunpack.c.l.b16 %v1202
        %v1291 = vunpack.c.l.b16 %v1203
        %v1292 = vunpack.c.h.b16 %v1202
        %v1293 = vunpack.c.h.b16 %v1203
        %v1294 = vunpack.c.l.b16 %v1204
        %v1295 = vunpack.c.l.b16 %v1205
        %v1296 = vunpack.c.h.b16 %v1204
        %v1297 = vunpack.c.h.b16 %v1205
        %v1298 = vunpack.c.l.b16 %v1206
        %v1299 = vunpack.c.l.b16 %v1207
        %v1300 = vunpack.c.h.b16 %v1206
        %v1301 = vunpack.c.h.b16 %v1207
        %v1302 = vunpack.c.l.b16 %v1208
        %v1303 = vunpack.c.l.b16 %v1209
        %v1304 = vunpack.c.h.b16 %v1208
        %v1305 = vunpack.c.h.b16 %v1209
        %v1306 = vpack.c.b16 %v1243, %v1242
        %v1307 = vpack.c.b16 %v1245, %v1244
        %v1308 = vpack.c.b16 %v1247, %v1246
        %v1309 = vpack.c.b16 %v1249, %v1248
        %v1310 = vpack.c.b16 %v1251, %v1250
        %v1311 = vpack.c.b16 %v1253, %v1252
        %v1312 = vpack.c.b16 %v1255, %v1254
        %v1313 = vpack.c.b16 %v1257, %v1256
        %v1314 = vpack.c.b16 %v1259, %v1258
        %v1315 = vpack.c.b16 %v1261, %v1260
        %v1316 = vpack.c.b16 %v1263, %v1262
        %v1317 = vpack.c.b16 %v1265, %v1264
        %v1318 = vpack.c.b16 %v1267, %v1266
        %v1319 = vpack.c.b16 %v1269, %v1268
        %v1320 = vpack.c.b16 %v1271, %v1270
        %v1321 = vpack.c.b16 %v1273, %v1272
        %v1322 = vpack.c.b16 %v1275, %v1274
        %v1323 = vpack.c.b16 %v1277, %v1276
        %v1324 = vpack.c.b16 %v1279, %v1278
        %v1325 = vpack.c.b16 %v1281, %v1280
        %v1326 = vpack.c.b16 %v1283, %v1282
        %v1327 = vpack.c.b16 %v1285, %v1284
        %v1328 = vpack.c.b16 %v1287, %v1286
        %v1329 = vpack.c.b16 %v1289, %v1288
        %v1330 = vpack.c.b16 %v1291, %v1290
        %v1331 = vpack.c.b16 %v1293, %v1292
        %v1332 = vpack.c.b16 %v1295, %v1294
        %v1333 = vpack.c.b16 %v1297, %v1296
        %v1334 = vpack.c.b16 %v1299, %v1298
        %v1335 = vpack.c.b16 %v1301, %v1300
        %v1336 = vpack.c.b16 %v1303, %v1302
        %v1337 = vpack.c.b16 %v1305, %v1304
        %1370 = vst [vmem:[%s218] sm:$0xff] %v1306
        %1371 = vst [vmem:[%s218 + $0x8] sm:$0xff] %v1307
        %1372 = vst [vmem:[%s218 + $0x10] sm:$0xff] %v1308
        %1373 = vst [vmem:[%s218 + $0x18] sm:$0xff] %v1309
        %1374 = vst [vmem:[%s218 + $0x20] sm:$0xff] %v1310
        %1375 = vst [vmem:[%s218 + $0x28] sm:$0xff] %v1311
        %1376 = vst [vmem:[%s218 + $0x30] sm:$0xff] %v1312
        %1377 = vst [vmem:[%s218 + $0x38] sm:$0xff] %v1313
        %1378 = vst [vmem:[%s218 + $0x40] sm:$0xff] %v1314
        %1379 = vst [vmem:[%s218 + $0x48] sm:$0xff] %v1315
        %1380 = vst [vmem:[%s218 + $0x50] sm:$0xff] %v1316
        %1381 = vst [vmem:[%s218 + $0x58] sm:$0xff] %v1317
        %1382 = vst [vmem:[%s218 + $0x60] sm:$0xff] %v1318
        %1383 = vst [vmem:[%s218 + $0x68] sm:$0xff] %v1319
        %1384 = vst [vmem:[%s218 + $0x70] sm:$0xff] %v1320
        %1385 = vst [vmem:[%s218 + $0x78] sm:$0xff] %v1321
        %1386 = vst [vmem:[%s218 + $0x80] sm:$0xff] %v1322
        %1387 = vst [vmem:[%s218 + $0x88] sm:$0xff] %v1323
        %1388 = vst [vmem:[%s218 + $0x90] sm:$0xff] %v1324
        %1389 = vst [vmem:[%s218 + $0x98] sm:$0xff] %v1325
        %1390 = vst [vmem:[%s218 + $0xa0] sm:$0xff] %v1326
        %1391 = vst [vmem:[%s218 + $0xa8] sm:$0xff] %v1327
        %1392 = vst [vmem:[%s218 + $0xb0] sm:$0xff] %v1328
        %1393 = vst [vmem:[%s218 + $0xb8] sm:$0xff] %v1329
        %1394 = vst [vmem:[%s218 + $0xc0] sm:$0xff] %v1330
        %1395 = vst [vmem:[%s218 + $0xc8] sm:$0xff] %v1331
        %1396 = vst [vmem:[%s218 + $0xd0] sm:$0xff] %v1332
        %1397 = vst [vmem:[%s218 + $0xd8] sm:$0xff] %v1333
        %1398 = vst [vmem:[%s218 + $0xe0] sm:$0xff] %v1334
        %1399 = vst [vmem:[%s218 + $0xe8] sm:$0xff] %v1335
        %1400 = vst [vmem:[%s218 + $0xf0] sm:$0xff] %v1336
        %1401 = vst [vmem:[%s218 + $0xf8] sm:$0xff] %v1337
        %s1402 = sand.u32 %s137, 1
        %s1403 = scalar_lea.sflag [#allocation3], %s1402
        %s1404 = sand.u32 %s137, 1
        %s1405 = smul.addr %s1404, 256
        %s1406 = scalar_lea.vmem [#allocation2], %s1405
        // Predicated region
        $region41: #{tpu_custom_call.1} parent=39 // pred_check
          %p1407 = pneg %p147
        $region42: #{tpu_custom_call.1} parent=39 // pred_check_branch
          %1409 = sbr.rel (%p1407) target = $region44
        $region43: #{tpu_custom_call.1} parent=39 // pred_region
          %s1410 = smul.u32 32, %s19
          %s1412 = ssub.s32 4096, 4096
          %1413 = vsyncadd %s1403, %s1412
          %s1414 = smul.addr %s1410, 2
          %s1415 = smul.addr %s1414, 64
          %s1416 = scalar_lea.hbm %s5, %s1415
          %s1417 = sshll.u32 %s1406, 4
          %s1418 = int_to_ptr.vmem [resolvable:$true] %s1417
          %1423 = dma.vmem_to_hbm [thread:$0]  %s1418, 4096, %s1416, %s1403, 128, 128, 8
        $region44: #{tpu_custom_call.1} parent=39 // pred_fallthru
          _
      $region40: #{tpu_custom_call.1} parent=5 // pred_fallthru
        _
      %p1424 = scmp.le.s32.totalorder 2, %s14
      // Predicated region
      $region45: #{tpu_custom_call.1} parent=5 // pred_check
        %p1425 = pneg %p1424
      $region46: #{tpu_custom_call.1} parent=5 // pred_check_branch
        %1427 = sbr.rel (%p1425) target = $region48
      $region47: #{tpu_custom_call.1} parent=5 // pred_region
        %s1428 = ssub.s32 %s14, 2
        // Predicated region
        $region49: #{tpu_custom_call.1} parent=47 // pred_check
          %p1429 = pneg %p153
        $region50: #{tpu_custom_call.1} parent=47 // pred_check_branch
          %1431 = sbr.rel (%p1429) target = $region52
        $region51: #{tpu_custom_call.1} parent=47 // pred_region
          %s1432 = sand.u32 %s138, 1
          %s1433 = scalar_lea.sflag [#allocation3], %s1432
          %s1434 = sand.u32 %s138, 1
          %s1435 = smul.addr %s1434, 256
          %s1436 = scalar_lea.vmem [#allocation2], %s1435
          %1437 = dma.done %s1433, 4096
        $region52: #{tpu_custom_call.1} parent=47 // pred_fallthru
          _
      $region48: #{tpu_custom_call.1} parent=5 // pred_fallthru
        _
    $region6: #{tpu_custom_call.1} parent=1 // loop_footer
      %s18 = sadd.s32 1, %s14
    $region7: #{tpu_custom_call.1} parent=1 // loop_footer_branch
      %13 = sbr.rel target = $region3
    $region8: #{tpu_custom_call.1} parent=1 // loop_exit
      _
    %1438 = vsyncpa [#allocation3], 1
    %s1439 = scalar_lea.sflag [#allocation3], 1
    %1440 = vsyncpa %s1439, 1

</llo_original>
